<compile_context>
chip_gen: v6e
topology: v6e:2x2x1
jax: 0.10.0
libtpu: 0.0.40
codegen_flags: <defaults>
</compile_context>

<pallas_src>
import functools

import jax
import jax.numpy as jnp
from jax.experimental import pallas as pl
from jax.experimental.pallas import tpu as pltpu


def _round_up(x: int, m: int) -> int:
    return ((x + m - 1) // m) * m


def _lasso_data_kernel(a_ref, x_ref, b_ref, out_ref):
    """Partial sum of squared residuals for one (block_m, Npad) tile of A."""
    # (block_m, Npad) * (1, Npad) broadcast  -> VPU elementwise multiply.
    prod = a_ref[...] * x_ref[...]
    # Lane reduce over N -> (block_m, 1) row dot products (XLU).
    rows = jnp.sum(prod, axis=-1, keepdims=True)
    r = rows - b_ref[...]                      # residual for this tile's rows
    partial = jnp.sum(r * r)                   # scalar partial sum-of-squares
    # Lane-dense, unmasked store of the partial (one full (8,128) vreg).
    out_ref[...] = jnp.full(out_ref.shape, partial, dtype=jnp.float32)


@functools.partial(jax.jit, static_argnames=("lmda", "block_m"))
def lasso_forward(A, b, x_param, x, lmda=0.2, block_m=None):
    """Computes 0.5*||A x - b||^2 + lmda*||x_param||_1 with a Pallas data term."""
    M, N = A.shape
    A = A.astype(jnp.float32)
    b = b.astype(jnp.float32)
    x = x.astype(jnp.float32)
    x_param = x_param.astype(jnp.float32)

    # Pad N to a lane-aligned multiple of 128 (zero cols of A / zero x entries
    # contribute nothing to A @ x).
    n_pad = _round_up(N, 128)

    # Pick an M-tile: ~2 MiB of A per block (double-buffered -> ~4 MiB), a
    # multiple of 8 sublanes, capped at 512. Safe within scoped VMEM on
    # v5e / v6e / v7x.
    if block_m is None:
        bm = (2 * 1024 * 1024) // (n_pad * 4)
        bm = max(8, (bm // 8) * 8)
        block_m = min(bm, 512, _round_up(M, 8))
    assert block_m % 8 == 0, "block_m must be a multiple of 8"

    m_pad = _round_up(M, block_m)
    n_tiles = m_pad // block_m

    # Zero padding: padded rows have A_row = 0 and b_row = 0 -> residual 0.
    A_p = jnp.zeros((m_pad, n_pad), jnp.float32).at[:M, :N].set(A)
    b_p = jnp.zeros((m_pad, 1), jnp.float32).at[:M, 0].set(b)
    x_p = jnp.zeros((1, n_pad), jnp.float32).at[0, :N].set(x)

    partials = pl.pallas_call(
        _lasso_data_kernel,
        out_shape=jax.ShapeDtypeStruct((n_tiles, 8, 128), jnp.float32),
        grid=(n_tiles,),
        in_specs=[
            pl.BlockSpec((block_m, n_pad), lambda i: (i, 0)),   # A tile
            pl.BlockSpec((1, n_pad), lambda i: (0, 0)),         # x row (resident)
            pl.BlockSpec((block_m, 1), lambda i: (i, 0)),       # b slice (tiny)
        ],
        out_specs=pl.BlockSpec((1, 8, 128), lambda i: (i, 0, 0)),
        compiler_params=pltpu.CompilerParams(
            dimension_semantics=("parallel",),     # independent M-tiles
            vmem_limit_bytes=32 * 1024 * 1024,
        ),
    )(A_p, x_p, b_p)

    # Tiny finalize in plain JAX: sum per-tile partials + L1 regularizer
    # (hoisted out of the gridded hot path per perf review).
    data_term = 0.5 * jnp.sum(partials[:, 0, 0])
    reg_term = lmda * jnp.sum(jnp.abs(x_param))
    return data_term + reg_term


if __name__ == "__main__":
    key = jax.random.PRNGKey(0)
    kA, kb, kxp, kx = jax.random.split(key, 4)

    # Small but non-trivial sizes; M, N deliberately NOT multiples of the tile
    # sizes so the zero-padding and multi-tile grid paths are exercised.
    M, N = 500, 300
    lmda = 0.2

    A = jax.random.normal(kA, (M, N), dtype=jnp.float32)
    b = jax.random.normal(kb, (M,), dtype=jnp.float32)
    # Deterministic stand-in for torch.nn.Parameter(torch.randn(N)).
    x_param = jax.random.normal(kxp, (N,), dtype=jnp.float32)
    # Forward input x (same length as the parameter: A.shape[1]).
    x = jax.random.normal(kx, (N,), dtype=jnp.float32)

    result = lasso_forward(A, b, x_param, x, lmda=lmda, block_m=128)
    result = jax.block_until_ready(result)

    # Pure-JAX reference (sqrt(.)**2 of the original module is the identity).
    ref = 0.5 * jnp.sum((A @ x - b) ** 2) + lmda * jnp.sum(jnp.abs(x_param))
    assert jnp.allclose(result, ref, rtol=1e-4, atol=1e-3), (result, ref)

    print("KERNEL_OK")
</pallas_src>

<mosaic_0001>
module attributes {stable_mosaic.version = 11 : i64} {
  func.func @_lasso_data_kernel(%arg0: i32, %arg1: memref<128x384xf32, #tpu.memory_space<vmem>>, %arg2: memref<1x384xf32, #tpu.memory_space<vmem>>, %arg3: memref<128x1xf32, #tpu.memory_space<vmem>>, %arg4: memref<1x8x128xf32, #tpu.memory_space<vmem>>) attributes {dimension_semantics = [#tpu.dimension_semantics<parallel>], iteration_bounds = array<i64: 4>, scalar_prefetch = 0 : i64, scratch_operands = 0 : i64, tpu.core_type = #tpu.core_type<tc>, window_params = [{transform_indices = @transform_0, window_bounds = array<i64: 128, 384>}, {pipeline_mode = #tpu.pipeline_mode<synchronous>, transform_indices = @transform_1, window_bounds = array<i64: 1, 384>}, {transform_indices = @transform_2, window_bounds = array<i64: 128, 1>}, {transform_indices = @transform_3, window_bounds = array<i64: 1, 8, 128>}]} {
    %c0 = arith.constant 0 : index
    %c0_0 = arith.constant 0 : index
    %0 = vector.load %arg1[%c0, %c0_0] : memref<128x384xf32, #tpu.memory_space<vmem>>, vector<128x384xf32>
    %c0_1 = arith.constant 0 : index
    %c0_2 = arith.constant 0 : index
    %1 = vector.load %arg2[%c0_1, %c0_2] : memref<1x384xf32, #tpu.memory_space<vmem>>, vector<1x384xf32>
    %2 = vector.broadcast %1 : vector<1x384xf32> to vector<128x384xf32>
    %3 = arith.mulf %0, %2 : vector<128x384xf32>
    %cst = arith.constant dense<0.000000e+00> : vector<128xf32>
    %4 = vector.multi_reduction <add>, %3, %cst [1] : vector<128x384xf32> to vector<128xf32>
    %5 = vector.shape_cast %4 : vector<128xf32> to vector<128x1xf32>
    %c0_3 = arith.constant 0 : index
    %c0_4 = arith.constant 0 : index
    %6 = vector.load %arg3[%c0_3, %c0_4] : memref<128x1xf32, #tpu.memory_space<vmem>>, vector<128x1xf32>
    %7 = arith.subf %5, %6 : vector<128x1xf32>
    %8 = arith.mulf %7, %7 : vector<128x1xf32>
    %9 = vector.shape_cast %8 : vector<128x1xf32> to vector<1x128x1xf32>
    %cst_5 = arith.constant dense<0.000000e+00> : vector<1xf32>
    %10 = vector.multi_reduction <add>, %9, %cst_5 [1, 2] : vector<1x128x1xf32> to vector<1xf32>
    %11 = vector.shape_cast %10 : vector<1xf32> to vector<1x1x1xf32>
    %12 = vector.extract %11[0, 0, 0] : f32 from vector<1x1x1xf32>
    %13 = vector.broadcast %12 : f32 to vector<1x8x128xf32>
    %c0_6 = arith.constant 0 : index
    %c0_7 = arith.constant 0 : index
    %c0_8 = arith.constant 0 : index
    %14 = vector.load %arg4[%c0_6, %c0_7, %c0_8] : memref<1x8x128xf32, #tpu.memory_space<vmem>>, vector<1x8x128xf32>
    tpu.vector_store %arg4[%c0_6, %c0_7, %c0_8], %13 {strides = array<i32>} : memref<1x8x128xf32, #tpu.memory_space<vmem>>, vector<1x8x128xf32>,
    return
  }
  func.func @transform_0(%arg0: i32) -> (i32, i32) {
    %c0_i32 = arith.constant 0 : i32
    %c0_i32_0 = arith.constant 0 : i32
    return %arg0, %c0_i32 : i32, i32
  }
  func.func @transform_1(%arg0: i32) -> (i32, i32) {
    %c0_i32 = arith.constant 0 : i32
    %c0_i32_0 = arith.constant 0 : i32
    %c0_i32_1 = arith.constant 0 : i32
    return %c0_i32, %c0_i32_0 : i32, i32
  }
  func.func @transform_2(%arg0: i32) -> (i32, i32) {
    %c0_i32 = arith.constant 0 : i32
    %c0_i32_0 = arith.constant 0 : i32
    return %arg0, %c0_i32 : i32, i32
  }
  func.func @transform_3(%arg0: i32) -> (i32, i32, i32) {
    %c0_i32 = arith.constant 0 : i32
    %c0_i32_0 = arith.constant 0 : i32
    %c0_i32_1 = arith.constant 0 : i32
    return %arg0, %c0_i32, %c0_i32_0 : i32, i32, i32
  }
}

</mosaic_0001>

<llo_original>
// kernel: lasso_forward.1
$region0: #{lasso_forward.1}
  #allocation0 [shape = 'u32[]', space=smem, size = 0x4, offset = 0x4, fixed_abs, tag = 'smem constant byte address 0x4 - core index']
  #allocation1 [shape = 'u32[144,128]{1,0:T(1,128)}', space=vmem, size = 0x12000, scoped, tag = 'internal scratch']
  %s0 = inlined_call_operand.vmem [shape: f32[512,384], index: 0, kind: input, shape index: {}]
  %s1 = inlined_call_operand.vmem [shape: f32[1,384], index: 1, kind: input, shape index: {}]
  %s2 = inlined_call_operand.vmem [shape: f32[512,1], index: 2, kind: input, shape index: {}]
  %s3 = inlined_call_operand.vmem [shape: f32[4,8,128], index: 3, kind: output, shape index: {}]
  %s4 = sld [smem:[#allocation0]]
  $region45: #{lasso_forward.1} parent=0
    _
  %s6 = ssub.s32 1, %s4
  %s7 = scalar_select 0, %s6, %s4
  loop: start=0, step=1, limit=6
  $region2: #{lasso_forward.1} parent=0 // loop_pre_header
    _
  $region3: #{lasso_forward.1} parent=0 // loop_header
    %s9 = sphi 0, %s13
    %p10 = scmp.ge.s32.totalorder %s9, 6
    %s19 = sphi 0, %s21
    %s22 = sphi 0, %s19
    %s23 = sphi 0, %s22
    %s39 = sphi 0, %s23
    %s43 = sphi 0, %s43
    %s45 = sphi 0, %s43
    %s46 = sphi 0, %s45
    %s60 = sphi 0, %s46
    %s66 = sphi 0, %s68
    %s69 = sphi 0, %s66
    %s70 = sphi 0, %s69
    %s86 = sphi 0, %s70
    %s92 = sphi 0, %s94
    %s95 = sphi 0, %s92
    %s96 = sphi 0, %s95
    %s112 = sphi 0, %s96
  $region4: #{lasso_forward.1} parent=0 // loop_header_branch
    %12 = sbr.rel (%p10) target = $region8
  $region5: #{lasso_forward.1} parent=0 // loop_body
    %s14 = ssub.s32 %s9, 1
    %s15 = ssub.s32 %s9, 2
    %s16 = sadd.s32 %s9, 1
    %s17 = ssub.s32 %s9, %s16
    %p18 = scmp.eq.s32.totalorder %s17, 0
    %s20 = sadd.s32 %s19, 1
    %s21 = scalar_select %p18, %s19, %s20
    %p24 = pneg %p18
    %p25 = scmp.eq.s32.totalorder %s9, 3
    %p26 = por %p24, %p25
    %p27 = scmp.ne.s32.totalorder %s19, %s22
    %p28 = scmp.eq.s32.totalorder %s9, 0
    %p29 = por %p27, %p28
    %p30 = scmp.ne.s32.totalorder %s19, %s22
    %p31 = scmp.eq.s32.totalorder %s14, 3
    %p32 = por %p30, %p31
    %p33 = scmp.ne.s32.totalorder %s22, %s23
    %p34 = scmp.eq.s32.totalorder %s14, 0
    %p35 = por %p33, %p34
    %p36 = scmp.ne.s32.totalorder %s22, %s23
    %p37 = scmp.eq.s32.totalorder %s15, 3
    %p38 = por %p36, %p37
    %p40 = scmp.ne.s32.totalorder %s23, %s39
    %p41 = scmp.eq.s32.totalorder %s15, 0
    %p42 = por %p40, %p41
    %s44 = sadd.s32 %s43, 1
    %p47 = scmp.eq.s32.totalorder %s9, 3
    %p48 = scmp.ne.s32.totalorder %s43, %s45
    %p49 = scmp.eq.s32.totalorder %s9, 0
    %p50 = por %p48, %p49
    %p51 = scmp.ne.s32.totalorder %s43, %s45
    %p52 = scmp.eq.s32.totalorder %s14, 3
    %p53 = por %p51, %p52
    %p54 = scmp.ne.s32.totalorder %s45, %s46
    %p55 = scmp.eq.s32.totalorder %s14, 0
    %p56 = por %p54, %p55
    %p57 = scmp.ne.s32.totalorder %s45, %s46
    %p58 = scmp.eq.s32.totalorder %s15, 3
    %p59 = por %p57, %p58
    %p61 = scmp.ne.s32.totalorder %s46, %s60
    %p62 = scmp.eq.s32.totalorder %s15, 0
    %p63 = por %p61, %p62
    %s64 = ssub.s32 %s9, %s16
    %p65 = scmp.eq.s32.totalorder %s64, 0
    %s67 = sadd.s32 %s66, 1
    %s68 = scalar_select %p65, %s66, %s67
    %p71 = pneg %p65
    %p72 = scmp.eq.s32.totalorder %s9, 3
    %p73 = por %p71, %p72
    %p74 = scmp.ne.s32.totalorder %s66, %s69
    %p75 = scmp.eq.s32.totalorder %s9, 0
    %p76 = por %p74, %p75
    %p77 = scmp.ne.s32.totalorder %s66, %s69
    %p78 = scmp.eq.s32.totalorder %s14, 3
    %p79 = por %p77, %p78
    %p80 = scmp.ne.s32.totalorder %s69, %s70
    %p81 = scmp.eq.s32.totalorder %s14, 0
    %p82 = por %p80, %p81
    %p83 = scmp.ne.s32.totalorder %s69, %s70
    %p84 = scmp.eq.s32.totalorder %s15, 3
    %p85 = por %p83, %p84
    %p87 = scmp.ne.s32.totalorder %s70, %s86
    %p88 = scmp.eq.s32.totalorder %s15, 0
    %p89 = por %p87, %p88
    %s90 = ssub.s32 %s9, %s16
    %p91 = scmp.eq.s32.totalorder %s90, 0
    %s93 = sadd.s32 %s92, 1
    %s94 = scalar_select %p91, %s92, %s93
    %p97 = pneg %p91
    %p98 = scmp.eq.s32.totalorder %s9, 3
    %p99 = por %p97, %p98
    %p100 = scmp.ne.s32.totalorder %s92, %s95
    %p101 = scmp.eq.s32.totalorder %s9, 0
    %p102 = por %p100, %p101
    %p103 = scmp.ne.s32.totalorder %s92, %s95
    %p104 = scmp.eq.s32.totalorder %s14, 3
    %p105 = por %p103, %p104
    %p106 = scmp.ne.s32.totalorder %s95, %s96
    %p107 = scmp.eq.s32.totalorder %s14, 0
    %p108 = por %p106, %p107
    %p109 = scmp.ne.s32.totalorder %s95, %s96
    %p110 = scmp.eq.s32.totalorder %s15, 3
    %p111 = por %p109, %p110
    %p113 = scmp.ne.s32.totalorder %s96, %s112
    %p114 = scmp.eq.s32.totalorder %s15, 0
    %p115 = por %p113, %p114
    %p116 = scmp.le.s32.totalorder 1, %s9
    %p117 = scmp.lt.s32.totalorder %s9, 5
    %p118 = pnand %p116, %p117
    %p119 = pneg %p118
    // Predicated region
    $region9: #{lasso_forward.1} parent=5 // pred_check
      _
    $region10: #{lasso_forward.1} parent=5 // pred_check_branch
      %121 = sbr.rel (%p118) target = $region12
    $region11: #{lasso_forward.1} parent=5 // pred_region
      %s122 = ssub.s32 %s9, 1
      // Predicated region
      $region13: #{lasso_forward.1} parent=11 // pred_check
        %p123 = pneg %p56
      $region14: #{lasso_forward.1} parent=11 // pred_check_branch
        %125 = sbr.rel (%p123) target = $region16
      $region15: #{lasso_forward.1} parent=11 // pred_region
        _
      $region16: #{lasso_forward.1} parent=11 // pred_fallthru
        _
    $region12: #{lasso_forward.1} parent=5 // pred_fallthru
      _
    %p126 = scmp.lt.s32.totalorder %s9, 4
    // Predicated region
    $region17: #{lasso_forward.1} parent=5 // pred_check
      %p127 = pneg %p126
    $region18: #{lasso_forward.1} parent=5 // pred_check_branch
      %129 = sbr.rel (%p127) target = $region20
    $region19: #{lasso_forward.1} parent=5 // pred_region
      // Predicated region
      $region21: #{lasso_forward.1} parent=19 // pred_check
        %p130 = pneg %p29
      $region22: #{lasso_forward.1} parent=19 // pred_check_branch
        %132 = sbr.rel (%p130) target = $region24
      $region23: #{lasso_forward.1} parent=19 // pred_region
        %s133 = smul.u32 16, %s9
        %p134 = scmp.lt.s32.totalorder %s133, 63
        %s135 = scalar_select %p134, %s133, 63
        %s136 = smul.addr %s135, 3
        %s137 = smul.addr %s136, 8
        %s138 = scalar_lea.vmem %s0, %s137
        %s139 = smul.u32 16, %s9
      $region24: #{lasso_forward.1} parent=19 // pred_fallthru
        _
      // Predicated region
      $region25: #{lasso_forward.1} parent=19 // pred_check
        %p140 = pneg %p76
      $region26: #{lasso_forward.1} parent=19 // pred_check_branch
        %142 = sbr.rel (%p140) target = $region28
      $region27: #{lasso_forward.1} parent=19 // pred_region
        %s143 = smul.u32 16, %s9
        %p144 = scmp.lt.s32.totalorder %s143, 63
        %s145 = scalar_select %p144, %s143, 63
        %s146 = smul.addr %s145, 8
        %s147 = scalar_lea.vmem %s2, %s146
        %s148 = smul.u32 16, %s9
      $region28: #{lasso_forward.1} parent=19 // pred_fallthru
        _
    $region20: #{lasso_forward.1} parent=5 // pred_fallthru
      _
    %p149 = scmp.le.s32.totalorder 1, %s9
    %p150 = scmp.lt.s32.totalorder %s9, 5
    %p151 = pnand %p149, %p150
    %p152 = pneg %p151
    // Predicated region
    $region29: #{lasso_forward.1} parent=5 // pred_check
      _
    $region30: #{lasso_forward.1} parent=5 // pred_check_branch
      %154 = sbr.rel (%p151) target = $region32
    $region31: #{lasso_forward.1} parent=5 // pred_region
      %s155 = ssub.s32 %s9, 1
      %s156 = smul.u32 16, %s14
      %p157 = scmp.lt.s32.totalorder %s156, 63
      %s158 = scalar_select %p157, %s156, 63
      %s159 = smul.addr %s158, 3
      %s160 = smul.addr %s159, 8
      %s161 = scalar_lea.vmem %s0, %s160
      %p162 = pneg %p35
      %p163 = pneg %p32
      %p164 = pneg %p56
      %p165 = pneg %p53
      %s166 = smul.u32 16, %s14
      %p167 = scmp.lt.s32.totalorder %s166, 63
      %s168 = scalar_select %p167, %s166, 63
      %s169 = smul.addr %s168, 8
      %s170 = scalar_lea.vmem %s2, %s169
      %p171 = pneg %p82
      %p172 = pneg %p79
      %p173 = pneg %p108
      %p174 = pneg %p105
      %p175 = scmp.lt.s32.totalorder %s14, 3
      %s176 = scalar_select %p175, %s14, 3
      %s177 = smul.addr %s176, 8
      %s178 = scalar_lea.vmem %s3, %s177
      %s179 = smul.u32 16, %s14
      %p180 = scmp.lt.s32.totalorder %s179, 63
      %s181 = scalar_select %p180, %s179, 63
      %s182 = smul.addr %s181, 3
      %s183 = smul.addr %s182, 8
      %s184 = scalar_lea.vmem %s0, %s183
      %s185 = smul.u32 16, %s14
      %s186 = smul.u32 16, %s14
      %p187 = scmp.lt.s32.totalorder %s186, 63
      %s188 = scalar_select %p187, %s186, 63
      %s189 = smul.addr %s188, 8
      %s190 = scalar_lea.vmem %s2, %s189
      %s191 = smul.u32 16, %s14
      %p192 = scmp.lt.s32.totalorder %s14, 3
      %s193 = scalar_select %p192, %s14, 3
      %s194 = smul.addr %s193, 8
      %s195 = scalar_lea.vmem %s3, %s194
      %v196 = vld [vmem:[%s184] sm:$0xff]
      %v197 = vld [vmem:[%s184 + $0x8] sm:$0xff]
      %v198 = vld [vmem:[%s184 + $0x10] sm:$0xff]
      %v199 = vld [vmem:[%s184 + $0x18] sm:$0xff]
      %v200 = vld [vmem:[%s184 + $0x20] sm:$0xff]
      %v201 = vld [vmem:[%s184 + $0x28] sm:$0xff]
      %v202 = vld [vmem:[%s184 + $0x30] sm:$0xff]
      %v203 = vld [vmem:[%s184 + $0x38] sm:$0xff]
      %v204 = vld [vmem:[%s184 + $0x40] sm:$0xff]
      %v205 = vld [vmem:[%s184 + $0x48] sm:$0xff]
      %v206 = vld [vmem:[%s184 + $0x50] sm:$0xff]
      %v207 = vld [vmem:[%s184 + $0x58] sm:$0xff]
      %v208 = vld [vmem:[%s184 + $0x60] sm:$0xff]
      %v209 = vld [vmem:[%s184 + $0x68] sm:$0xff]
      %v210 = vld [vmem:[%s184 + $0x70] sm:$0xff]
      %v211 = vld [vmem:[%s184 + $0x78] sm:$0xff]
      %v212 = vld [vmem:[%s184 + $0x80] sm:$0xff]
      %v213 = vld [vmem:[%s184 + $0x88] sm:$0xff]
      %v214 = vld [vmem:[%s184 + $0x90] sm:$0xff]
      %v215 = vld [vmem:[%s184 + $0x98] sm:$0xff]
      %v216 = vld [vmem:[%s184 + $0xa0] sm:$0xff]
      %v217 = vld [vmem:[%s184 + $0xa8] sm:$0xff]
      %v218 = vld [vmem:[%s184 + $0xb0] sm:$0xff]
      %v219 = vld [vmem:[%s184 + $0xb8] sm:$0xff]
      %v220 = vld [vmem:[%s184 + $0xc0] sm:$0xff]
      %v221 = vld [vmem:[%s184 + $0xc8] sm:$0xff]
      %v222 = vld [vmem:[%s184 + $0xd0] sm:$0xff]
      %v223 = vld [vmem:[%s184 + $0xd8] sm:$0xff]
      %v224 = vld [vmem:[%s184 + $0xe0] sm:$0xff]
      %v225 = vld [vmem:[%s184 + $0xe8] sm:$0xff]
      %v226 = vld [vmem:[%s184 + $0xf0] sm:$0xff]
      %v227 = vld [vmem:[%s184 + $0xf8] sm:$0xff]
      %v228 = vld [vmem:[%s184 + $0x100] sm:$0xff]
      %v229 = vld [vmem:[%s184 + $0x108] sm:$0xff]
      %v230 = vld [vmem:[%s184 + $0x110] sm:$0xff]
      %v231 = vld [vmem:[%s184 + $0x118] sm:$0xff]
      %v232 = vld [vmem:[%s184 + $0x120] sm:$0xff]
      %v233 = vld [vmem:[%s184 + $0x128] sm:$0xff]
      %v234 = vld [vmem:[%s184 + $0x130] sm:$0xff]
      %v235 = vld [vmem:[%s184 + $0x138] sm:$0xff]
      %v236 = vld [vmem:[%s184 + $0x140] sm:$0xff]
      %v237 = vld [vmem:[%s184 + $0x148] sm:$0xff]
      %v238 = vld [vmem:[%s184 + $0x150] sm:$0xff]
      %v239 = vld [vmem:[%s184 + $0x158] sm:$0xff]
      %v240 = vld [vmem:[%s184 + $0x160] sm:$0xff]
      %v241 = vld [vmem:[%s184 + $0x168] sm:$0xff]
      %v242 = vld [vmem:[%s184 + $0x170] sm:$0xff]
      %v243 = vld [vmem:[%s184 + $0x178] sm:$0xff]
      %v244 = vld [vmem:[%s1] sm:$0x7]
      %v246 = vlaneseq
      %v247 = vshrl.u32 %v246, 7
      %v248 = vsub.s32 0, %v247
      %v249 = vrot.slane %v244, %v248
      %v250 = vlaneseq
      %v251 = vshrl.u32 %v250, 7
      %v252 = vsub.s32 1, %v251
      %v253 = vrot.slane %v244, %v252
      %v254 = vlaneseq
      %v255 = vshrl.u32 %v254, 7
      %v256 = vsub.s32 2, %v255
      %v257 = vrot.slane %v244, %v256
      %v261 = vmul.f32 %v196, %v249
      %v262 = vmul.f32 %v197, %v253
      %v263 = vmul.f32 %v198, %v257
      %v264 = vmul.f32 %v199, %v249
      %v265 = vmul.f32 %v200, %v253
      %v266 = vmul.f32 %v201, %v257
      %v267 = vmul.f32 %v202, %v249
      %v268 = vmul.f32 %v203, %v253
      %v269 = vmul.f32 %v204, %v257
      %v270 = vmul.f32 %v205, %v249
      %v271 = vmul.f32 %v206, %v253
      %v272 = vmul.f32 %v207, %v257
      %v273 = vmul.f32 %v208, %v249
      %v274 = vmul.f32 %v209, %v253
      %v275 = vmul.f32 %v210, %v257
      %v276 = vmul.f32 %v211, %v249
      %v277 = vmul.f32 %v212, %v253
      %v278 = vmul.f32 %v213, %v257
      %v279 = vmul.f32 %v214, %v249
      %v280 = vmul.f32 %v215, %v253
      %v281 = vmul.f32 %v216, %v257
      %v282 = vmul.f32 %v217, %v249
      %v283 = vmul.f32 %v218, %v253
      %v284 = vmul.f32 %v219, %v257
      %v285 = vmul.f32 %v220, %v249
      %v286 = vmul.f32 %v221, %v253
      %v287 = vmul.f32 %v222, %v257
      %v288 = vmul.f32 %v223, %v249
      %v289 = vmul.f32 %v224, %v253
      %v290 = vmul.f32 %v225, %v257
      %v291 = vmul.f32 %v226, %v249
      %v292 = vmul.f32 %v227, %v253
      %v293 = vmul.f32 %v228, %v257
      %v294 = vmul.f32 %v229, %v249
      %v295 = vmul.f32 %v230, %v253
      %v296 = vmul.f32 %v231, %v257
      %v297 = vmul.f32 %v232, %v249
      %v298 = vmul.f32 %v233, %v253
      %v299 = vmul.f32 %v234, %v257
      %v300 = vmul.f32 %v235, %v249
      %v301 = vmul.f32 %v236, %v253
      %v302 = vmul.f32 %v237, %v257
      %v303 = vmul.f32 %v238, %v249
      %v304 = vmul.f32 %v239, %v253
      %v305 = vmul.f32 %v240, %v257
      %v306 = vmul.f32 %v241, %v249
      %v307 = vmul.f32 %v242, %v253
      %v308 = vmul.f32 %v243, %v257
      %v309 = vadd.f32 %v261, %v262
      %v310 = vadd.f32 %v309, %v263
      %311 = vadd.xlane.f32.xlu0 %v310
      %v312 = vpop.xlane.xlu0 %311
      %v313 = vadd.f32 %v264, %v265
      %v314 = vadd.f32 %v313, %v266
      %315 = vadd.xlane.f32.xlu0 %v314
      %v316 = vpop.xlane.xlu0 %315
      %v317 = vadd.f32 %v267, %v268
      %v318 = vadd.f32 %v317, %v269
      %319 = vadd.xlane.f32.xlu0 %v318
      %v320 = vpop.xlane.xlu0 %319
      %v321 = vadd.f32 %v270, %v271
      %v322 = vadd.f32 %v321, %v272
      %323 = vadd.xlane.f32.xlu0 %v322
      %v324 = vpop.xlane.xlu0 %323
      %v325 = vadd.f32 %v273, %v274
      %v326 = vadd.f32 %v325, %v275
      %327 = vadd.xlane.f32.xlu0 %v326
      %v328 = vpop.xlane.xlu0 %327
      %v329 = vadd.f32 %v276, %v277
      %v330 = vadd.f32 %v329, %v278
      %331 = vadd.xlane.f32.xlu0 %v330
      %v332 = vpop.xlane.xlu0 %331
      %v333 = vadd.f32 %v279, %v280
      %v334 = vadd.f32 %v333, %v281
      %335 = vadd.xlane.f32.xlu0 %v334
      %v336 = vpop.xlane.xlu0 %335
      %v337 = vadd.f32 %v282, %v283
      %v338 = vadd.f32 %v337, %v284
      %339 = vadd.xlane.f32.xlu0 %v338
      %v340 = vpop.xlane.xlu0 %339
      %v341 = vadd.f32 %v285, %v286
      %v342 = vadd.f32 %v341, %v287
      %343 = vadd.xlane.f32.xlu0 %v342
      %v344 = vpop.xlane.xlu0 %343
      %v345 = vadd.f32 %v288, %v289
      %v346 = vadd.f32 %v345, %v290
      %347 = vadd.xlane.f32.xlu0 %v346
      %v348 = vpop.xlane.xlu0 %347
      %v349 = vadd.f32 %v291, %v292
      %v350 = vadd.f32 %v349, %v293
      %351 = vadd.xlane.f32.xlu0 %v350
      %v352 = vpop.xlane.xlu0 %351
      %v353 = vadd.f32 %v294, %v295
      %v354 = vadd.f32 %v353, %v296
      %355 = vadd.xlane.f32.xlu0 %v354
      %v356 = vpop.xlane.xlu0 %355
      %v357 = vadd.f32 %v297, %v298
      %v358 = vadd.f32 %v357, %v299
      %359 = vadd.xlane.f32.xlu0 %v358
      %v360 = vpop.xlane.xlu0 %359
      %v361 = vadd.f32 %v300, %v301
      %v362 = vadd.f32 %v361, %v302
      %363 = vadd.xlane.f32.xlu0 %v362
      %v364 = vpop.xlane.xlu0 %363
      %v365 = vadd.f32 %v303, %v304
      %v366 = vadd.f32 %v365, %v305
      %367 = vadd.xlane.f32.xlu0 %v366
      %v368 = vpop.xlane.xlu0 %367
      %v369 = vadd.f32 %v306, %v307
      %v370 = vadd.f32 %v369, %v308
      %371 = vadd.xlane.f32.xlu0 %v370
      %v372 = vpop.xlane.xlu0 %371
      %v373 = vld [vmem:[%s190] sm:$0xff]
      %v374 = vld [vmem:[%s190 + $0x8] sm:$0xff]
      %v375 = vld [vmem:[%s190 + $0x10] sm:$0xff]
      %v376 = vld [vmem:[%s190 + $0x18] sm:$0xff]
      %v377 = vld [vmem:[%s190 + $0x20] sm:$0xff]
      %v378 = vld [vmem:[%s190 + $0x28] sm:$0xff]
      %v379 = vld [vmem:[%s190 + $0x30] sm:$0xff]
      %v380 = vld [vmem:[%s190 + $0x38] sm:$0xff]
      %v381 = vld [vmem:[%s190 + $0x40] sm:$0xff]
      %v382 = vld [vmem:[%s190 + $0x48] sm:$0xff]
      %v383 = vld [vmem:[%s190 + $0x50] sm:$0xff]
      %v384 = vld [vmem:[%s190 + $0x58] sm:$0xff]
      %v385 = vld [vmem:[%s190 + $0x60] sm:$0xff]
      %v386 = vld [vmem:[%s190 + $0x68] sm:$0xff]
      %v387 = vld [vmem:[%s190 + $0x70] sm:$0xff]
      %v388 = vld [vmem:[%s190 + $0x78] sm:$0xff]
      %v389 = vsub.f32 %v312, %v373
      %v390 = vsub.f32 %v316, %v374
      %v391 = vsub.f32 %v320, %v375
      %v392 = vsub.f32 %v324, %v376
      %v393 = vsub.f32 %v328, %v377
      %v394 = vsub.f32 %v332, %v378
      %v395 = vsub.f32 %v336, %v379
      %v396 = vsub.f32 %v340, %v380
      %v397 = vsub.f32 %v344, %v381
      %v398 = vsub.f32 %v348, %v382
      %v399 = vsub.f32 %v352, %v383
      %v400 = vsub.f32 %v356, %v384
      %v401 = vsub.f32 %v360, %v385
      %v402 = vsub.f32 %v364, %v386
      %v403 = vsub.f32 %v368, %v387
      %v404 = vsub.f32 %v372, %v388
      %v405 = vmul.f32 %v389, %v389
      %v406 = vmul.f32 %v390, %v390
      %v407 = vmul.f32 %v391, %v391
      %v408 = vmul.f32 %v392, %v392
      %v409 = vmul.f32 %v393, %v393
      %v410 = vmul.f32 %v394, %v394
      %v411 = vmul.f32 %v395, %v395
      %v412 = vmul.f32 %v396, %v396
      %v413 = vmul.f32 %v397, %v397
      %v414 = vmul.f32 %v398, %v398
      %v415 = vmul.f32 %v399, %v399
      %v416 = vmul.f32 %v400, %v400
      %v417 = vmul.f32 %v401, %v401
      %v418 = vmul.f32 %v402, %v402
      %v419 = vmul.f32 %v403, %v403
      %v420 = vmul.f32 %v404, %v404
      %vm421 = vcmask 7168
      %v422 = vsel %vm421, %v405, 0.0
      %v423 = vsel %vm421, %v406, 0.0
      %v424 = vadd.f32 %v422, %v423
      %v425 = vsel %vm421, %v407, 0.0
      %v426 = vadd.f32 %v424, %v425
      %v427 = vsel %vm421, %v408, 0.0
      %v428 = vadd.f32 %v426, %v427
      %v429 = vsel %vm421, %v409, 0.0
      %v430 = vadd.f32 %v428, %v429
      %v431 = vsel %vm421, %v410, 0.0
      %v432 = vadd.f32 %v430, %v431
      %v433 = vsel %vm421, %v411, 0.0
      %v434 = vadd.f32 %v432, %v433
      %v435 = vsel %vm421, %v412, 0.0
      %v436 = vadd.f32 %v434, %v435
      %v437 = vsel %vm421, %v413, 0.0
      %v438 = vadd.f32 %v436, %v437
      %v439 = vsel %vm421, %v414, 0.0
      %v440 = vadd.f32 %v438, %v439
      %v441 = vsel %vm421, %v415, 0.0
      %v442 = vadd.f32 %v440, %v441
      %v443 = vsel %vm421, %v416, 0.0
      %v444 = vadd.f32 %v442, %v443
      %v445 = vsel %vm421, %v417, 0.0
      %v446 = vadd.f32 %v444, %v445
      %v447 = vsel %vm421, %v418, 0.0
      %v448 = vadd.f32 %v446, %v447
      %v449 = vsel %vm421, %v419, 0.0
      %v450 = vadd.f32 %v448, %v449
      %v451 = vsel %vm421, %v420, 0.0
      %v452 = vadd.f32 %v450, %v451
      %453 = vadd.xlane.f32.xlu0 %v452
      %v454 = vpop.xlane.xlu0 %453
      %v455 = vrot.slane %v454, 4
      %v456 = vadd.f32 %v454, %v455
      %v457 = vrot.slane %v456, 2
      %v458 = vadd.f32 %v456, %v457
      %v459 = vrot.slane %v458, 1
      %v460 = vadd.f32 %v458, %v459
      %s461 = vtos %v460
      %v462 = vstv %s461
      %463 = vst [vmem:[%s195] sm:$0xff] %v462
      %p464 = scmp.lt.s32.totalorder %s14, 3
      %s465 = scalar_select %p464, %s14, 3
      %s466 = smul.addr %s465, 8
      %s467 = scalar_lea.vmem %s3, %s466
      // Predicated region
      $region33: #{lasso_forward.1} parent=31 // pred_check
        %p468 = pneg %p105
      $region34: #{lasso_forward.1} parent=31 // pred_check_branch
        %470 = sbr.rel (%p468) target = $region36
      $region35: #{lasso_forward.1} parent=31 // pred_region
        _
      $region36: #{lasso_forward.1} parent=31 // pred_fallthru
        _
    $region32: #{lasso_forward.1} parent=5 // pred_fallthru
      _
    %p471 = scmp.le.s32.totalorder 2, %s9
    // Predicated region
    $region37: #{lasso_forward.1} parent=5 // pred_check
      %p472 = pneg %p471
    $region38: #{lasso_forward.1} parent=5 // pred_check_branch
      %474 = sbr.rel (%p472) target = $region40
    $region39: #{lasso_forward.1} parent=5 // pred_region
      %s475 = ssub.s32 %s9, 2
      // Predicated region
      $region41: #{lasso_forward.1} parent=39 // pred_check
        %p476 = pneg %p111
      $region42: #{lasso_forward.1} parent=39 // pred_check_branch
        %478 = sbr.rel (%p476) target = $region44
      $region43: #{lasso_forward.1} parent=39 // pred_region
        %p479 = scmp.lt.s32.totalorder %s15, 3
        %s480 = scalar_select %p479, %s15, 3
        %s481 = smul.addr %s480, 8
        %s482 = scalar_lea.vmem %s3, %s481
      $region44: #{lasso_forward.1} parent=39 // pred_fallthru
        _
    $region40: #{lasso_forward.1} parent=5 // pred_fallthru
      _
  $region6: #{lasso_forward.1} parent=0 // loop_footer
    %s13 = sadd.s32 1, %s9
  $region7: #{lasso_forward.1} parent=0 // loop_footer_branch
    %8 = sbr.rel target = $region3
  $region8: #{lasso_forward.1} parent=0 // loop_exit
    _

</llo_original>
